<compile_context>
chip_gen: v7x
topology: tpu7x:2x2x1
jax: 0.10.0
libtpu: 0.0.40
codegen_flags: <defaults>
</compile_context>

<pallas_src>
import jax
import jax.numpy as jnp
from jax.experimental import pallas as pl
from jax.experimental.pallas import tpu as pltpu


def conv_relu_kernel(p_ref, w_ref, b_ref, o_ref):
    # (tm, K)bf16 @ (K, OC_pad)bf16 on the MXU with f32 accumulation;
    # bias + ReLU fused into the single store expression (pure VPU filler).
    acc = jnp.dot(p_ref[...], w_ref[...], preferred_element_type=jnp.float32)
    o_ref[...] = jnp.maximum(acc + b_ref[...], 0.0)


def _round_up(a, b):
    return ((a + b - 1) // b) * b


def _vmem_budget_bytes():
    # Generation-aware scoped-VMEM budget: half of physical VMEM
    # (v5e/v6e: 128 MiB -> 64 MiB; v7x: 64 MiB -> 32 MiB).
    try:
        phys = pltpu.get_tpu_info().vmem_capacity_bytes
    except Exception:
        phys = 64 << 20  # most conservative generation (v7x per-TC)
    return min(phys // 2, 64 << 20)


def _derive_tm(tm_req, M, K, OC_pad, vmem_bytes):
    """Pick the row tile: as large as requested, but VMEM-safe and >=2 grid tiles."""
    # double-buffered bf16 LHS tile + double-buffered f32 output tile, per row,
    # plus the resident bf16 weights and f32 bias.
    per_row = 2 * K * 2 + 2 * OC_pad * 4
    resident = K * OC_pad * 2 + OC_pad * 4
    cap = max(8, (vmem_bytes - resident) // per_row)
    tm = min(tm_req, cap)
    # keep the grid length >= 2 so the 'parallel' axis can shard across the
    # two TensorCores on v7x (and megacore on other gens).
    if M > 16:
        tm = min(tm, _round_up(-(-M // 2), 8))
    return max(8, (tm // 8) * 8)


def conv_layer_forward(x_nchw, weight, bias, *, stride=2, padding=1, tm=512):
    """Forward of ConvLayer: Conv2d(kernel=3, stride=2, pad=1) + ReLU.

    x_nchw : (N, C, H, W) float32   (PyTorch NCHW convention)
    weight : (OC, C, 3, 3) float32  (PyTorch OIHW convention)
    bias   : (OC,) float32
    returns: (N, OC, OH, OW) float32
    """
    N, C, H, W = x_nchw.shape
    OC, _, KH, KW = weight.shape
    OH = (H + 2 * padding - KH) // stride + 1
    OW = (W + 2 * padding - KW) // stride + 1
    K = KH * KW * C
    M = N * OH * OW
    OC_pad = _round_up(OC, 128)  # lane-dense output stores

    # ---- layout glue: im2col in plain JAX (cast to bf16 early to halve bytes) ----
    x_nhwc = jnp.transpose(x_nchw, (0, 2, 3, 1)).astype(jnp.bfloat16)
    x_pad = jnp.pad(x_nhwc, ((0, 0), (padding, padding), (padding, padding), (0, 0)))
    cols = []
    for kh in range(KH):
        for kw in range(KW):
            sl = x_pad[:, kh:kh + stride * OH:stride, kw:kw + stride * OW:stride, :]
            cols.append(sl)                                    # (N, OH, OW, C)
    patches = jnp.stack(cols, axis=3).reshape(M, K)            # bf16 (M, K)

    # weight (OC, C, KH, KW) -> (KH, KW, C, OC) -> (K, OC) -> zero-pad OC to 128.
    w2d = jnp.transpose(weight, (2, 3, 1, 0)).reshape(K, OC)
    w2d = jnp.pad(w2d, ((0, 0), (0, OC_pad - OC))).astype(jnp.bfloat16)
    b2d = jnp.pad(bias, (0, OC_pad - OC)).reshape(1, OC_pad).astype(jnp.float32)

    vmem_limit = _vmem_budget_bytes()
    tm_eff = _derive_tm(tm, M, K, OC_pad, int(vmem_limit * 0.75))
    M_pad = _round_up(M, tm_eff)
    patches = jnp.pad(patches, ((0, M_pad - M), (0, 0)))

    out = pl.pallas_call(
        conv_relu_kernel,
        out_shape=jax.ShapeDtypeStruct((M_pad, OC_pad), jnp.float32),
        grid=(M_pad // tm_eff,),
        in_specs=[
            pl.BlockSpec((tm_eff, K), lambda i: (i, 0)),     # patch rows tiled over grid
            pl.BlockSpec((K, OC_pad), lambda i: (0, 0)),     # weights resident
            pl.BlockSpec((1, OC_pad), lambda i: (0, 0)),     # bias resident
        ],
        out_specs=pl.BlockSpec((tm_eff, OC_pad), lambda i: (i, 0)),
        compiler_params=pltpu.CompilerParams(
            dimension_semantics=("parallel",),
            vmem_limit_bytes=vmem_limit,
            allow_input_fusion=[True, True, True],  # fold im2col/pad into input DMA
        ),
    )(patches, w2d, b2d)

    out = out[:M, :OC].reshape(N, OH, OW, OC)       # drop row/OC padding
    return jnp.transpose(out, (0, 3, 1, 2))         # back to NCHW


if __name__ == "__main__":
    # small shapes consistent with the module: N=2, input_dim=4, H=W=16, output_dim=8
    N, C, H, W, OC = 2, 4, 16, 16, 8

    key = jax.random.PRNGKey(0)
    kx, kw, kb = jax.random.split(key, 3)
    x = jax.random.normal(kx, (N, C, H, W), dtype=jnp.float32)
    # deterministic synthetic parameters (same shapes as nn.Conv2d(4, 8, 3, 2, 1))
    weight = jax.random.normal(kw, (OC, C, 3, 3), dtype=jnp.float32) * 0.1
    bias = jax.random.normal(kb, (OC,), dtype=jnp.float32) * 0.1

    y = jax.block_until_ready(conv_layer_forward(x, weight, bias))

    # reference: same bf16-quantized operands, f32 accumulation (matches the MXU path)
    xq = x.astype(jnp.bfloat16).astype(jnp.float32)
    wq = weight.astype(jnp.bfloat16).astype(jnp.float32)
    ref = jax.lax.conv_general_dilated(
        xq, wq, window_strides=(2, 2), padding=((1, 1), (1, 1)),
        dimension_numbers=("NCHW", "OIHW", "NCHW"))
    ref = jnp.maximum(ref + bias[None, :, None, None], 0.0)

    assert y.shape == (N, OC, 8, 8), y.shape
    err = float(jnp.max(jnp.abs(y - ref)))
    assert err < 2e-3, err
    print("KERNEL_OK")
</pallas_src>

<mosaic_0001>
module attributes {stable_mosaic.version = 11 : i64} {
  func.func @conv_relu_kernel(%arg0: i32, %arg1: memref<64x36xbf16, #tpu.memory_space<vmem>>, %arg2: memref<36x128xbf16, #tpu.memory_space<vmem>>, %arg3: memref<1x128xf32, #tpu.memory_space<vmem>>, %arg4: memref<64x128xf32, #tpu.memory_space<vmem>>) attributes {dimension_semantics = [#tpu.dimension_semantics<parallel>], iteration_bounds = array<i64: 2>, scalar_prefetch = 0 : i64, scratch_operands = 0 : i64, tpu.core_type = #tpu.core_type<tc>, window_params = [{transform_indices = @transform_0, window_bounds = array<i64: 64, 36>}, {pipeline_mode = #tpu.pipeline_mode<synchronous>, transform_indices = @transform_1, window_bounds = array<i64: 36, 128>}, {pipeline_mode = #tpu.pipeline_mode<synchronous>, transform_indices = @transform_2, window_bounds = array<i64: 1, 128>}, {transform_indices = @transform_3, window_bounds = array<i64: 64, 128>}]} {
    %c0 = arith.constant 0 : index
    %c0_0 = arith.constant 0 : index
    %0 = vector.load %arg1[%c0, %c0_0] : memref<64x36xbf16, #tpu.memory_space<vmem>>, vector<64x36xbf16>
    %c0_1 = arith.constant 0 : index
    %c0_2 = arith.constant 0 : index
    %1 = vector.load %arg2[%c0_1, %c0_2] : memref<36x128xbf16, #tpu.memory_space<vmem>>, vector<36x128xbf16>
    %cst = arith.constant dense<0.000000e+00> : vector<64x128xf32>
    %2 = tpu.matmul %0, %1, %cst {dimension_numbers = #tpu.dot_dimension_numbers<[1], [0], [0], [1], [0, 0, 1, 1], [], []>} : vector<64x36xbf16>, vector<36x128xbf16>, vector<64x128xf32> -> vector<64x128xf32>
    %c0_3 = arith.constant 0 : index
    %c0_4 = arith.constant 0 : index
    %3 = vector.load %arg3[%c0_3, %c0_4] : memref<1x128xf32, #tpu.memory_space<vmem>>, vector<1x128xf32>
    %4 = vector.broadcast %3 : vector<1x128xf32> to vector<64x128xf32>
    %5 = arith.addf %2, %4 : vector<64x128xf32>
    %cst_5 = arith.constant 0.000000e+00 : f32
    %6 = vector.broadcast %cst_5 : f32 to vector<64x128xf32>
    %7 = arith.maximumf %5, %6 : vector<64x128xf32>
    %c0_6 = arith.constant 0 : index
    %c0_7 = arith.constant 0 : index
    %8 = vector.load %arg4[%c0_6, %c0_7] : memref<64x128xf32, #tpu.memory_space<vmem>>, vector<64x128xf32>
    tpu.vector_store %arg4[%c0_6, %c0_7], %7 {strides = array<i32>} : memref<64x128xf32, #tpu.memory_space<vmem>>, vector<64x128xf32>,
    return
  }
  func.func @transform_0(%arg0: i32) -> (i32, i32) {
    %c0_i32 = arith.constant 0 : i32
    %c0_i32_0 = arith.constant 0 : i32
    return %arg0, %c0_i32 : i32, i32
  }
  func.func @transform_1(%arg0: i32) -> (i32, i32) {
    %c0_i32 = arith.constant 0 : i32
    %c0_i32_0 = arith.constant 0 : i32
    %c0_i32_1 = arith.constant 0 : i32
    return %c0_i32, %c0_i32_0 : i32, i32
  }
  func.func @transform_2(%arg0: i32) -> (i32, i32) {
    %c0_i32 = arith.constant 0 : i32
    %c0_i32_0 = arith.constant 0 : i32
    %c0_i32_1 = arith.constant 0 : i32
    return %c0_i32, %c0_i32_0 : i32, i32
  }
  func.func @transform_3(%arg0: i32) -> (i32, i32) {
    %c0_i32 = arith.constant 0 : i32
    %c0_i32_0 = arith.constant 0 : i32
    return %arg0, %c0_i32 : i32, i32
  }
}

</mosaic_0001>

<llo_original>
// kernel: tpu_custom_call.1
$region0: #{tpu_custom_call.1}
  #allocation0 [shape = 'u32[]', space=smem, size = 0x4, offset = 0x4, fixed_abs, tag = 'smem constant byte address 0x4 - core index']
  #allocation1 [shape = 'u32[144,128]{1,0:T(1,128)}', space=vmem, size = 0x12000, scoped, tag = 'internal scratch']
  %s0 = inlined_call_operand.vmem [shape: bf16[128,36], index: 0, kind: input, shape index: {}]
  %s1 = inlined_call_operand.vmem [shape: bf16[36,128], index: 1, kind: input, shape index: {}]
  %s2 = inlined_call_operand.vmem [shape: f32[1,128], index: 2, kind: input, shape index: {}]
  %s3 = inlined_call_operand.hbm [shape: f32[128,128], index: 3, kind: output, shape index: {}]
  %s4 = sld [smem:[#allocation0]]
  $region45: #{tpu_custom_call.1} parent=0
    _
  %s6 = ssub.s32 1, %s4
  %s7 = scalar_select 0, %s6, %s4
  $region1: #{tpu_custom_call.1} parent=0
    #allocation2 [shape = 'u8[65536]{0}', space=vmem, size = 0x10000, scoped, tag = 'output window, operand 0']
    #allocation3 [shape = 's32[2]{0}', space=sflag, size = 0x8, scoped, tag = 'scoped memory for tpu_custom_call.1']
    %8 = vsyncpa [#allocation3], 0
    %s9 = scalar_lea.sflag [#allocation3], 1
    %10 = vsyncpa %s9, 0
    loop: start=0, step=1, limit=4
    $region2: #{tpu_custom_call.1} parent=1 // loop_pre_header
      _
    $region3: #{tpu_custom_call.1} parent=1 // loop_header
      %s12 = sphi 0, %s16
      %p13 = scmp.ge.s32.totalorder %s12, 4
      %s22 = sphi 0, %s24
      %s25 = sphi 0, %s22
      %s26 = sphi 0, %s25
      %s42 = sphi 0, %s26
      %s46 = sphi 0, %s46
      %s48 = sphi 0, %s46
      %s49 = sphi 0, %s48
      %s63 = sphi 0, %s49
      %s67 = sphi 0, %s67
      %s69 = sphi 0, %s67
      %s70 = sphi 0, %s69
      %s84 = sphi 0, %s70
      %s90 = sphi 0, %s92
      %s93 = sphi 0, %s90
      %s94 = sphi 0, %s93
      %s110 = sphi 0, %s94
    $region4: #{tpu_custom_call.1} parent=1 // loop_header_branch
      %15 = sbr.rel (%p13) target = $region8
    $region5: #{tpu_custom_call.1} parent=1 // loop_body
      %s17 = ssub.s32 %s12, 1
      %s18 = ssub.s32 %s12, 2
      %s19 = sadd.s32 %s12, 1
      %s20 = ssub.s32 %s12, %s19
      %p21 = scmp.eq.s32.totalorder %s20, 0
      %s23 = sadd.s32 %s22, 1
      %s24 = scalar_select %p21, %s22, %s23
      %p27 = pneg %p21
      %p28 = scmp.eq.s32.totalorder %s12, 1
      %p29 = por %p27, %p28
      %p30 = scmp.ne.s32.totalorder %s22, %s25
      %p31 = scmp.eq.s32.totalorder %s12, 0
      %p32 = por %p30, %p31
      %p33 = scmp.ne.s32.totalorder %s22, %s25
      %p34 = scmp.eq.s32.totalorder %s17, 1
      %p35 = por %p33, %p34
      %p36 = scmp.ne.s32.totalorder %s25, %s26
      %p37 = scmp.eq.s32.totalorder %s17, 0
      %p38 = por %p36, %p37
      %p39 = scmp.ne.s32.totalorder %s25, %s26
      %p40 = scmp.eq.s32.totalorder %s18, 1
      %p41 = por %p39, %p40
      %p43 = scmp.ne.s32.totalorder %s26, %s42
      %p44 = scmp.eq.s32.totalorder %s18, 0
      %p45 = por %p43, %p44
      %s47 = sadd.s32 %s46, 1
      %p50 = scmp.eq.s32.totalorder %s12, 1
      %p51 = scmp.ne.s32.totalorder %s46, %s48
      %p52 = scmp.eq.s32.totalorder %s12, 0
      %p53 = por %p51, %p52
      %p54 = scmp.ne.s32.totalorder %s46, %s48
      %p55 = scmp.eq.s32.totalorder %s17, 1
      %p56 = por %p54, %p55
      %p57 = scmp.ne.s32.totalorder %s48, %s49
      %p58 = scmp.eq.s32.totalorder %s17, 0
      %p59 = por %p57, %p58
      %p60 = scmp.ne.s32.totalorder %s48, %s49
      %p61 = scmp.eq.s32.totalorder %s18, 1
      %p62 = por %p60, %p61
      %p64 = scmp.ne.s32.totalorder %s49, %s63
      %p65 = scmp.eq.s32.totalorder %s18, 0
      %p66 = por %p64, %p65
      %s68 = sadd.s32 %s67, 1
      %p71 = scmp.eq.s32.totalorder %s12, 1
      %p72 = scmp.ne.s32.totalorder %s67, %s69
      %p73 = scmp.eq.s32.totalorder %s12, 0
      %p74 = por %p72, %p73
      %p75 = scmp.ne.s32.totalorder %s67, %s69
      %p76 = scmp.eq.s32.totalorder %s17, 1
      %p77 = por %p75, %p76
      %p78 = scmp.ne.s32.totalorder %s69, %s70
      %p79 = scmp.eq.s32.totalorder %s17, 0
      %p80 = por %p78, %p79
      %p81 = scmp.ne.s32.totalorder %s69, %s70
      %p82 = scmp.eq.s32.totalorder %s18, 1
      %p83 = por %p81, %p82
      %p85 = scmp.ne.s32.totalorder %s70, %s84
      %p86 = scmp.eq.s32.totalorder %s18, 0
      %p87 = por %p85, %p86
      %s88 = ssub.s32 %s12, %s19
      %p89 = scmp.eq.s32.totalorder %s88, 0
      %s91 = sadd.s32 %s90, 1
      %s92 = scalar_select %p89, %s90, %s91
      %p95 = pneg %p89
      %p96 = scmp.eq.s32.totalorder %s12, 1
      %p97 = por %p95, %p96
      %p98 = scmp.ne.s32.totalorder %s90, %s93
      %p99 = scmp.eq.s32.totalorder %s12, 0
      %p100 = por %p98, %p99
      %p101 = scmp.ne.s32.totalorder %s90, %s93
      %p102 = scmp.eq.s32.totalorder %s17, 1
      %p103 = por %p101, %p102
      %p104 = scmp.ne.s32.totalorder %s93, %s94
      %p105 = scmp.eq.s32.totalorder %s17, 0
      %p106 = por %p104, %p105
      %p107 = scmp.ne.s32.totalorder %s93, %s94
      %p108 = scmp.eq.s32.totalorder %s18, 1
      %p109 = por %p107, %p108
      %p111 = scmp.ne.s32.totalorder %s94, %s110
      %p112 = scmp.eq.s32.totalorder %s18, 0
      %p113 = por %p111, %p112
      %p114 = scmp.le.s32.totalorder 1, %s12
      %p115 = scmp.lt.s32.totalorder %s12, 3
      %p116 = pnand %p114, %p115
      %p117 = pneg %p116
      // Predicated region
      $region9: #{tpu_custom_call.1} parent=5 // pred_check
        _
      $region10: #{tpu_custom_call.1} parent=5 // pred_check_branch
        %119 = sbr.rel (%p116) target = $region12
      $region11: #{tpu_custom_call.1} parent=5 // pred_region
        %s120 = ssub.s32 %s12, 1
        // Predicated region
        $region13: #{tpu_custom_call.1} parent=11 // pred_check
          %p121 = pneg %p59
        $region14: #{tpu_custom_call.1} parent=11 // pred_check_branch
          %123 = sbr.rel (%p121) target = $region16
        $region15: #{tpu_custom_call.1} parent=11 // pred_region
          _
        $region16: #{tpu_custom_call.1} parent=11 // pred_fallthru
          _
        // Predicated region
        $region17: #{tpu_custom_call.1} parent=11 // pred_check
          %p124 = pneg %p80
        $region18: #{tpu_custom_call.1} parent=11 // pred_check_branch
          %126 = sbr.rel (%p124) target = $region20
        $region19: #{tpu_custom_call.1} parent=11 // pred_region
          _
        $region20: #{tpu_custom_call.1} parent=11 // pred_fallthru
          _
      $region12: #{tpu_custom_call.1} parent=5 // pred_fallthru
        _
      %p127 = scmp.lt.s32.totalorder %s12, 2
      // Predicated region
      $region21: #{tpu_custom_call.1} parent=5 // pred_check
        %p128 = pneg %p127
      $region22: #{tpu_custom_call.1} parent=5 // pred_check_branch
        %130 = sbr.rel (%p128) target = $region24
      $region23: #{tpu_custom_call.1} parent=5 // pred_region
        // Predicated region
        $region25: #{tpu_custom_call.1} parent=23 // pred_check
          %p131 = pneg %p32
        $region26: #{tpu_custom_call.1} parent=23 // pred_check_branch
          %133 = sbr.rel (%p131) target = $region28
        $region27: #{tpu_custom_call.1} parent=23 // pred_region
          %s134 = smul.u32 8, %s12
          %p135 = scmp.lt.s32.totalorder %s134, 15
          %s136 = scalar_select %p135, %s134, 15
          %s137 = smul.addr %s136, 4
          %s138 = scalar_lea.vmem %s0, %s137
          %s139 = smul.u32 8, %s12
        $region28: #{tpu_custom_call.1} parent=23 // pred_fallthru
          _
      $region24: #{tpu_custom_call.1} parent=5 // pred_fallthru
        _
      %p140 = scmp.le.s32.totalorder 1, %s12
      %p141 = scmp.lt.s32.totalorder %s12, 3
      %p142 = pnand %p140, %p141
      %p143 = pneg %p142
      // Predicated region
      $region29: #{tpu_custom_call.1} parent=5 // pred_check
        _
      $region30: #{tpu_custom_call.1} parent=5 // pred_check_branch
        %145 = sbr.rel (%p142) target = $region32
      $region31: #{tpu_custom_call.1} parent=5 // pred_region
        %s146 = ssub.s32 %s12, 1
        %s147 = smul.u32 8, %s17
        %p148 = scmp.lt.s32.totalorder %s147, 15
        %s149 = scalar_select %p148, %s147, 15
        %s150 = smul.addr %s149, 4
        %s151 = scalar_lea.vmem %s0, %s150
        %p152 = pneg %p38
        %p153 = pneg %p35
        %p154 = pneg %p59
        %p155 = pneg %p56
        %p156 = pneg %p80
        %p157 = pneg %p77
        %p158 = pneg %p106
        %p159 = pneg %p103
        %s160 = sand.u32 %s93, 1
        %s161 = scalar_lea.sflag [#allocation3], %s160
        %s162 = sand.u32 %s93, 1
        %s163 = smul.addr %s162, 64
        %s164 = scalar_lea.vmem [#allocation2], %s163
        %s165 = smul.u32 8, %s17
        %p166 = scmp.lt.s32.totalorder %s165, 15
        %s167 = scalar_select %p166, %s165, 15
        %s168 = smul.addr %s167, 4
        %s169 = scalar_lea.vmem %s0, %s168
        %s170 = smul.u32 8, %s17
        %s171 = smul.u32 8, %s17
        %v173 = vld [vmem:[%s169] sm:$0xf]
        %v174 = vld [vmem:[%s169 + $0x4] sm:$0xf]
        %v175 = vld [vmem:[%s169 + $0x8] sm:$0xf]
        %v176 = vld [vmem:[%s169 + $0xc] sm:$0xf]
        %v177 = vld [vmem:[%s169 + $0x10] sm:$0xf]
        %v178 = vld [vmem:[%s169 + $0x14] sm:$0xf]
        %v179 = vld [vmem:[%s169 + $0x18] sm:$0xf]
        %v180 = vld [vmem:[%s169 + $0x1c] sm:$0xf]
        %v181 = vld [vmem:[%s1] sm:$0xf]
        %v182 = vld [vmem:[%s1 + $0x4] sm:$0xf]
        %v183 = vld [vmem:[%s1 + $0x8] sm:$0xf]
        %v184 = vld [vmem:[%s1 + $0xc] sm:$0xf]
        %v185 = vld [vmem:[%s1 + $0x10] sm:$0x3]
        %v186 = vld [vmem:[%s2] sm:$0x1]
        %v188 = vlaneseq
        %v189 = vshrl.u32 %v188, 7
        %v190 = vsub.s32 0, %v189
        %v191 = vrot.slane %v186, %v190
        %v201 = vunpack.c.l.b16 %v173
        %v202 = vunpack.c.l.b16 %v174
        %v203 = vunpack.c.l.b16 %v175
        %v204 = vunpack.c.l.b16 %v176
        %v205 = vunpack.c.l.b16 %v177
        %v206 = vunpack.c.l.b16 %v178
        %v207 = vunpack.c.l.b16 %v179
        %v208 = vunpack.c.l.b16 %v180
        %v209 = vpack.c.b16 %v202, %v201
        %v210 = vpack.c.b16 %v204, %v203
        %v211 = vpack.c.b16 %v206, %v205
        %v212 = vpack.c.b16 %v208, %v207
        %v218 = vunpack.c.l.b16 %v181
        %v219 = vunpack.c.l.b16 %v182
        %v220 = vunpack.c.l.b16 %v183
        %v221 = vunpack.c.l.b16 %v184
        %v222 = vunpack.c.l.b16 %v185
        %v223 = vpack.c.b16 %v219, %v218
        %v224 = vpack.c.b16 %v221, %v220
        %v225 = vpack.c.b16 %v222, %v222
        %vm228 = vcmask 293888
        %v230 = vsel %vm228, %v209, 0
        %v233 = vsel %vm228, %v210, 0
        %v236 = vsel %vm228, %v211, 0
        %v239 = vsel %vm228, %v212, 0
        %vm241 = vcmask 1041408
        %v243 = vsel %vm241, %v225, 0
        %245 = vmatprep.subr.bf16.mxu0 0
        %246 = vmatpush1.bf16.msra.mxu0 %v223
        %247 = vmatprep.subr.bf16.mxu0 0
        %248 = vmatpush1.bf16.msra.mxu0 %v224
        %249 = vmatprep.subr.bf16.mxu0 0
        %250 = vmatpush1.bf16.msra.mxu0 %v243
        %251 = vmatprep.subr.bf16.mxu0 0
        %252 = vmatpush1.bf16.msra.mxu0 0
        %253 = vmatprep.subr.bf16.mxu0 0
        %254 = vmatpush1.bf16.msra.mxu0 0
        %255 = vmatprep.subr.bf16.mxu0 0
        %256 = vmatpush1.bf16.msra.mxu0 0
        %257 = vmatprep.subr.bf16.mxu0 0
        %258 = vmatpush1.bf16.msra.mxu0 0
        %259 = vmatprep.subr.bf16.mxu0 0
        %260 = vmatpush1.bf16.msra.mxu0 0
        %261 = vmatprep.subr.bf16.mxu0 0
        %262 = vmatpush1.bf16.msra.mxu0 0
        %263 = vmatprep.subr.bf16.mxu0 0
        %264 = vmatpush1.bf16.msra.mxu0 0
        %265 = vmatprep.subr.bf16.mxu0 0
        %266 = vmatpush1.bf16.msra.mxu0 0
        %267 = vmatprep.subr.bf16.mxu0 0
        %268 = vmatpush1.bf16.msra.mxu0 0
        %269 = vmatprep.subr.bf16.mxu0 0
        %270 = vmatpush1.bf16.msra.mxu0 0
        %271 = vmatprep.subr.bf16.mxu0 0
        %272 = vmatpush1.bf16.msra.mxu0 0
        %273 = vmatprep.subr.bf16.mxu0 0
        %274 = vmatpush1.bf16.msra.mxu0 0
        %275 = vmatprep.subr.bf16.mxu0 0
        %276 = vmatpush1.bf16.msra.mxu0 0
        %277 = vmatprep.mubr.bf16.mxu0 0
        %278 = vmatmul.mubr.bf16.gmra.mrb[0].mxu0 %v230
        %v279 = vpop.f32.mrb[0].mxu0
        %v280 = vadd.f32 %v191, %v279
        %v281 = vpop.f32.mrb[0].mxu0
        %v282 = vpop.f32.mrb[0].mxu0
        %v283 = vadd.f32 %v191, %v282
        %v284 = vpop.f32.mrb[0].mxu0
        %285 = vmatprep.mubr.bf16.mxu0 0
        %286 = vmatmul.mubr.bf16.gmra.mrb[0].mxu0 %v233
        %v287 = vpop.f32.mrb[0].mxu0
        %v288 = vadd.f32 %v191, %v287
        %v289 = vpop.f32.mrb[0].mxu0
        %v290 = vpop.f32.mrb[0].mxu0
        %v291 = vadd.f32 %v191, %v290
        %v292 = vpop.f32.mrb[0].mxu0
        %293 = vmatprep.mubr.bf16.mxu0 0
        %294 = vmatmul.mubr.bf16.gmra.mrb[0].mxu0 %v236
        %v295 = vpop.f32.mrb[0].mxu0
        %v296 = vadd.f32 %v191, %v295
        %v297 = vpop.f32.mrb[0].mxu0
        %v298 = vpop.f32.mrb[0].mxu0
        %v299 = vadd.f32 %v191, %v298
        %v300 = vpop.f32.mrb[0].mxu0
        %301 = vmatprep.mubr.bf16.mxu0 0
        %302 = vmatmul.mubr.bf16.gmra.mrb[0].mxu0 %v239
        %v303 = vpop.f32.mrb[0].mxu0
        %v304 = vadd.f32 %v191, %v303
        %v305 = vpop.f32.mrb[0].mxu0
        %v306 = vpop.f32.mrb[0].mxu0
        %v307 = vadd.f32 %v191, %v306
        %v308 = vpop.f32.mrb[0].mxu0
        %309 = vdwg.mxu0
        %v310 = vmax.f32 %v280, 0.0
        %v311 = vmax.f32 %v283, 0.0
        %v312 = vmax.f32 %v288, 0.0
        %v313 = vmax.f32 %v291, 0.0
        %v314 = vmax.f32 %v296, 0.0
        %v315 = vmax.f32 %v299, 0.0
        %v316 = vmax.f32 %v304, 0.0
        %v317 = vmax.f32 %v307, 0.0
        %318 = vst [vmem:[%s164] sm:$0xff] %v310
        %319 = vst [vmem:[%s164 + $0x8] sm:$0xff] %v311
        %320 = vst [vmem:[%s164 + $0x10] sm:$0xff] %v312
        %321 = vst [vmem:[%s164 + $0x18] sm:$0xff] %v313
        %322 = vst [vmem:[%s164 + $0x20] sm:$0xff] %v314
        %323 = vst [vmem:[%s164 + $0x28] sm:$0xff] %v315
        %324 = vst [vmem:[%s164 + $0x30] sm:$0xff] %v316
        %325 = vst [vmem:[%s164 + $0x38] sm:$0xff] %v317
        %s326 = sand.u32 %s93, 1
        %s327 = scalar_lea.sflag [#allocation3], %s326
        %s328 = sand.u32 %s93, 1
        %s329 = smul.addr %s328, 64
        %s330 = scalar_lea.vmem [#allocation2], %s329
        // Predicated region
        $region33: #{tpu_custom_call.1} parent=31 // pred_check
          %p331 = pneg %p103
        $region34: #{tpu_custom_call.1} parent=31 // pred_check_branch
          %333 = sbr.rel (%p331) target = $region36
        $region35: #{tpu_custom_call.1} parent=31 // pred_region
          %s334 = smul.u32 8, %s17
          %s336 = ssub.s32 1024, 1024
          %337 = vsyncadd %s327, %s336
          %s338 = smul.addr %s334, 128
          %s339 = scalar_lea.hbm %s3, %s338
          %s340 = sshll.u32 %s330, 4
          %s341 = int_to_ptr.vmem [resolvable:$true] %s340
          %346 = dma.vmem_to_hbm [thread:$0]  %s341, 1024, %s339, %s327, 128, 128, 8
        $region36: #{tpu_custom_call.1} parent=31 // pred_fallthru
          _
      $region32: #{tpu_custom_call.1} parent=5 // pred_fallthru
        _
      %p347 = scmp.le.s32.totalorder 2, %s12
      // Predicated region
      $region37: #{tpu_custom_call.1} parent=5 // pred_check
        %p348 = pneg %p347
      $region38: #{tpu_custom_call.1} parent=5 // pred_check_branch
        %350 = sbr.rel (%p348) target = $region40
      $region39: #{tpu_custom_call.1} parent=5 // pred_region
        %s351 = ssub.s32 %s12, 2
        // Predicated region
        $region41: #{tpu_custom_call.1} parent=39 // pred_check
          %p352 = pneg %p109
        $region42: #{tpu_custom_call.1} parent=39 // pred_check_branch
          %354 = sbr.rel (%p352) target = $region44
        $region43: #{tpu_custom_call.1} parent=39 // pred_region
          %s355 = sand.u32 %s94, 1
          %s356 = scalar_lea.sflag [#allocation3], %s355
          %s357 = sand.u32 %s94, 1
          %s358 = smul.addr %s357, 64
          %s359 = scalar_lea.vmem [#allocation2], %s358
          %360 = dma.done %s356, 1024
        $region44: #{tpu_custom_call.1} parent=39 // pred_fallthru
          _
      $region40: #{tpu_custom_call.1} parent=5 // pred_fallthru
        _
    $region6: #{tpu_custom_call.1} parent=1 // loop_footer
      %s16 = sadd.s32 1, %s12
    $region7: #{tpu_custom_call.1} parent=1 // loop_footer_branch
      %11 = sbr.rel target = $region3
    $region8: #{tpu_custom_call.1} parent=1 // loop_exit
      _
    %361 = vsyncpa [#allocation3], 1
    %s362 = scalar_lea.sflag [#allocation3], 1
    %363 = vsyncpa %s362, 1

</llo_original>
